<compile_context>
chip_gen: v7x
topology: tpu7x:2x2x1
jax: 0.10.0
libtpu: 0.0.40
codegen_flags: <defaults>
</compile_context>

<pallas_src>
import functools

import jax
import jax.numpy as jnp
from jax import lax
from jax.experimental import pallas as pl
from jax.experimental.pallas import tpu as pltpu


def _round_up(x: int, m: int) -> int:
    return ((x + m - 1) // m) * m


def _vmem_ceiling_bytes() -> int:
    """Chip-aware VMEM ceiling (v5e/v6e ~128 MiB, v7x 64 MiB) with a v7x-safe fallback."""
    try:
        cap = int(pltpu.get_tpu_info().vmem_capacity_bytes)
        return int(cap * 0.85)
    except Exception:
        return 56 << 20  # safe under the v7x 64 MiB physical VMEM


# --------------------------------------------------------------------------------------
# Kernel 1: embedding lookup (one-hot on MXU) + tanh-RNN recurrence + running max over time
# --------------------------------------------------------------------------------------
def rnn_max_kernel(ids_ref,    # (Tc, TB)        int32   streamed id chunk
                   etab_ref,   # (V_pad, H_pad)  bf16    folded table E @ W_ih + b (resident)
                   whh_ref,    # (H_pad, H_pad)  bf16    hidden->hidden (resident, (in, out))
                   mx_ref,     # (TB, H_pad)     f32     output: running max (resident over t)
                   h_ref,      # (TB, H_pad)     f32     scratch: recurrent hidden state
                   *, seq_len, mask_tail):
    t_chunk = pl.program_id(1)

    @pl.when(t_chunk == 0)
    def _init():
        h_ref[...] = jnp.zeros_like(h_ref)
        mx_ref[...] = jnp.full(mx_ref.shape, -jnp.inf, mx_ref.dtype)

    Tc, TB = ids_ref.shape
    Vp, Hp = etab_ref.shape

    # Whole-chunk embedding "gather" as one MXU matmul: one_hot(ids) @ E'.
    ids = ids_ref[...]                                                    # (Tc, TB) int32
    onehot = (ids[..., None] ==
              lax.broadcasted_iota(jnp.int32, (Tc, TB, Vp), 2)).astype(jnp.bfloat16)
    x = jnp.dot(onehot.reshape(Tc * TB, Vp), etab_ref[...],
                preferred_element_type=jnp.float32).reshape(Tc, TB, Hp)   # (Tc, TB, Hp) f32

    whh = whh_ref[...]                                                    # bf16
    h = h_ref[...]                                                        # f32 state
    m = mx_ref[...]                                                       # f32 running max
    base_t = t_chunk * Tc

    # Serial recurrence over the chunk; static Python loop => fully unrolled for the
    # LLO scheduler (equivalent to lax.fori_loop(..., unroll=True) with static indices).
    for i in range(Tc):
        h = jnp.tanh(x[i] + jnp.dot(h.astype(jnp.bfloat16), whh,
                                    preferred_element_type=jnp.float32))
        if mask_tail:
            valid = (base_t + i) < seq_len          # padded time steps don't touch the max
            m = jnp.where(valid, jnp.maximum(m, h), m)
        else:
            m = jnp.maximum(m, h)

    h_ref[...] = h
    mx_ref[...] = m


# --------------------------------------------------------------------------------------
# Kernel 2: head on the aggregated state: tanh -> linear -> dropout(eval) -> tanh -> proj
# --------------------------------------------------------------------------------------
def head_kernel(mx_ref,     # (TB, H_pad)    f32
                wlin_ref,   # (H_pad, H_pad) bf16
                blin_ref,   # (1, H_pad)     f32
                wproj_ref,  # (H_pad, C_pad) bf16
                bproj_ref,  # (1, C_pad)     f32
                out_ref):   # (TB, C_pad)    f32
    z = jnp.tanh(mx_ref[...])
    lin = jnp.dot(z.astype(jnp.bfloat16), wlin_ref[...],
                  preferred_element_type=jnp.float32) + blin_ref[...]
    # TODO(synk): nn.Dropout(p=0.3) is identity in eval mode; train-mode stochastic masking
    # (pltpu.prng_seed / pltpu.prng_random_bits + 1/(1-p) scaling) intentionally omitted.
    z2 = jnp.tanh(lin)
    out_ref[...] = jnp.dot(z2.astype(jnp.bfloat16), wproj_ref[...],
                           preferred_element_type=jnp.float32) + bproj_ref[...]


# --------------------------------------------------------------------------------------
# Wrapper
# --------------------------------------------------------------------------------------
def charlm_forward(input_batch, params, *, time_chunk=None):
    """input_batch: (B, T) int32 token ids. Returns (B, num_classes) f32 logits."""
    emb = params["embedding"].astype(jnp.float32)     # (V, H)
    w_ih = params["w_ih"].astype(jnp.float32)         # (H, H)  (in, out)
    w_hh = params["w_hh"].astype(jnp.float32)         # (H, H)  (in, out)
    b_rnn = params["b_rnn"].astype(jnp.float32)       # (1, H)  = b_ih + b_hh
    w_lin = params["w_lin"].astype(jnp.float32)       # (H, H)
    b_lin = params["b_lin"].astype(jnp.float32)       # (1, H)
    w_proj = params["w_proj"].astype(jnp.float32)     # (H, C)
    b_proj = params["b_proj"].astype(jnp.float32)     # (1, C)

    V, H = emb.shape
    C = b_proj.shape[-1]
    B, T = input_batch.shape

    # ---- lane/sublane-friendly padding --------------------------------------------------
    H_pad = _round_up(H, 128)      # lane-dense hidden dim (MXU K/N fully fed)
    C_pad = _round_up(C, 128)      # lane-dense output store
    V_pad = _round_up(V, 8)        # sublane-aligned table rows (char vocab is tiny)

    # Fold x @ W_ih + (b_ih + b_hh) into the embedding table (amortized over all B*T uses),
    # zero-pad, and cast the MXU operands to bf16.
    etab = jnp.dot(emb, w_ih, preferred_element_type=jnp.float32) + b_rnn          # (V, H)
    etab = jnp.pad(etab, ((0, V_pad - V), (0, H_pad - H))).astype(jnp.bfloat16)
    w_hh_p = jnp.pad(w_hh, ((0, H_pad - H), (0, H_pad - H))).astype(jnp.bfloat16)
    w_lin_p = jnp.pad(w_lin, ((0, H_pad - H), (0, H_pad - H))).astype(jnp.bfloat16)
    b_lin_p = jnp.pad(b_lin, ((0, 0), (0, H_pad - H)))
    w_proj_p = jnp.pad(w_proj, ((0, H_pad - H), (0, C_pad - C))).astype(jnp.bfloat16)
    b_proj_p = jnp.pad(b_proj, ((0, 0), (0, C_pad - C)))

    # ---- batch tiling: aim for >=2 tiles (feeds both v7x TensorCores) once B_pad >= 16 ---
    B8 = _round_up(B, 8)
    TB = max(8, min(128, _round_up(-(-B8 // 2), 8)))
    B_pad = _round_up(B, TB)
    nb = B_pad // TB

    # ---- time chunking: Tc recurrence steps per grid step (multiple of 8 sublanes) -------
    if time_chunk is None:
        Tc = min(32, _round_up(min(T, 32), 8))
    else:
        Tc = _round_up(time_chunk, 8)
    T_pad = _round_up(T, Tc)
    nt = T_pad // Tc
    mask_tail = (T_pad != T)

    # ids laid out as (nb, T_pad, TB): each grid step streams one (Tc, TB) int32 block.
    ids = jnp.pad(input_batch.astype(jnp.int32), ((0, B_pad - B), (0, T_pad - T)))
    ids_tiled = jnp.transpose(ids.reshape(nb, TB, T_pad), (0, 2, 1))

    # ---- VMEM budget (assume even constant-index-map inputs may be double-buffered) ------
    vmem_est = (2 * Tc * TB * 4                 # streamed id chunk (x2 pipeline buffers)
                + 2 * V_pad * H_pad * 2         # folded table (bf16)
                + 2 * H_pad * H_pad * 2         # w_hh (bf16)
                + 2 * TB * H_pad * 4            # resident output (running max)
                + TB * H_pad * 4                # h scratch
                + Tc * TB * (V_pad * 2 + H_pad * 4))   # one-hot + x intermediates
    ceiling = _vmem_ceiling_bytes()
    vmem_limit = int(min(ceiling, max(2 * vmem_est, 16 << 20)))

    const = lambda b, t: (0, 0)
    maxout = pl.pallas_call(
        functools.partial(rnn_max_kernel, seq_len=T, mask_tail=mask_tail),
        out_shape=jax.ShapeDtypeStruct((B_pad, H_pad), jnp.float32),
        grid=(nb, nt),                                             # reduction (time) axis last
        in_specs=[
            pl.BlockSpec((None, Tc, TB), lambda b, t: (b, t, 0)),  # streamed id chunk
            pl.BlockSpec((V_pad, H_pad), const),                   # folded emb table (resident)
            pl.BlockSpec((H_pad, H_pad), const),                   # w_hh (resident)
        ],
        out_specs=pl.BlockSpec((TB, H_pad), lambda b, t: (b, 0)),  # running max, resident over t
        scratch_shapes=[pltpu.VMEM((TB, H_pad), jnp.float32)],     # recurrent hidden state
        compiler_params=pltpu.CompilerParams(
            dimension_semantics=("parallel", "arbitrary"),
            vmem_limit_bytes=vmem_limit,
        ),
    )(ids_tiled, etab, w_hh_p)

    out = pl.pallas_call(
        head_kernel,
        out_shape=jax.ShapeDtypeStruct((B_pad, C_pad), jnp.float32),
        grid=(nb,),
        in_specs=[
            pl.BlockSpec((TB, H_pad), lambda b: (b, 0)),
            pl.BlockSpec((H_pad, H_pad), lambda b: (0, 0)),
            pl.BlockSpec((1, H_pad), lambda b: (0, 0)),
            pl.BlockSpec((H_pad, C_pad), lambda b: (0, 0)),
            pl.BlockSpec((1, C_pad), lambda b: (0, 0)),
        ],
        out_specs=pl.BlockSpec((TB, C_pad), lambda b: (b, 0)),
        compiler_params=pltpu.CompilerParams(
            dimension_semantics=("parallel",),
        ),
    )(maxout, w_lin_p, b_lin_p, w_proj_p, b_proj_p)

    return out[:B, :C]


# --------------------------------------------------------------------------------------
# Pure-JAX f32 reference (matches the PyTorch module in eval mode, aggregation='max')
# --------------------------------------------------------------------------------------
def charlm_reference(input_batch, params):
    emb = jnp.take(params["embedding"], input_batch, axis=0).astype(jnp.float32)  # (B, T, H)
    B, T, H = emb.shape

    def step(h, x_t):
        h_new = jnp.tanh(x_t @ params["w_ih"] + h @ params["w_hh"] + params["b_rnn"])
        return h_new, h_new

    h0 = jnp.zeros((B, H), jnp.float32)
    _, hs = jax.lax.scan(step, h0, jnp.transpose(emb, (1, 0, 2)))   # (T, B, H)
    agg = jnp.max(hs, axis=0)                                       # max over time
    z = jnp.tanh(agg)
    lin = z @ params["w_lin"] + params["b_lin"]
    z2 = jnp.tanh(lin)                                              # dropout = identity (eval)
    return z2 @ params["w_proj"] + params["b_proj"]


def init_params(key, hidden_dim, vocab_size, num_classes):
    ks = jax.random.split(key, 8)
    s = 0.1
    return {
        "embedding": s * jax.random.normal(ks[0], (vocab_size, hidden_dim), jnp.float32),
        # RNN weights stored pre-transposed to (in, out) so kernels compute x @ W.
        "w_ih": s * jax.random.normal(ks[1], (hidden_dim, hidden_dim), jnp.float32),
        "w_hh": s * jax.random.normal(ks[2], (hidden_dim, hidden_dim), jnp.float32),
        # b_ih + b_hh folded into one bias, kept 2-D for TPU-friendly broadcast.
        "b_rnn": s * jax.random.normal(ks[3], (1, hidden_dim), jnp.float32),
        "w_lin": s * jax.random.normal(ks[4], (hidden_dim, hidden_dim), jnp.float32),
        "b_lin": s * jax.random.normal(ks[5], (1, hidden_dim), jnp.float32),
        "w_proj": s * jax.random.normal(ks[6], (hidden_dim, num_classes), jnp.float32),
        "b_proj": s * jax.random.normal(ks[7], (1, num_classes), jnp.float32),
    }


if __name__ == "__main__":
    B, T = 2, 8
    hidden_dim, vocab_size, num_classes = 32, 16, 4

    key = jax.random.PRNGKey(0)
    pkey, dkey = jax.random.split(key)
    params = init_params(pkey, hidden_dim, vocab_size, num_classes)
    input_batch = jax.random.randint(dkey, (B, T), 0, vocab_size, dtype=jnp.int32)

    pred = charlm_forward(input_batch, params)
    jax.block_until_ready(pred)
    assert pred.shape == (B, num_classes)

    ref = charlm_reference(input_batch, params)
    # bf16 MXU operands => tolerance appropriate for bf16 matmul accumulation through the
    # T-step recurrence; still far tighter than any functional bug would produce.
    assert jnp.allclose(pred, ref, rtol=5e-2, atol=5e-3), "kernel/reference mismatch"

    print("KERNEL_OK")
</pallas_src>

<mosaic_0001>
module attributes {stable_mosaic.version = 11 : i64} {
  func.func @rnn_max_kernel(%arg0: i32, %arg1: i32, %arg2: memref<1x8x8xi32, #tpu.memory_space<vmem>>, %arg3: memref<16x128xbf16, #tpu.memory_space<vmem>>, %arg4: memref<128x128xbf16, #tpu.memory_space<vmem>>, %arg5: memref<8x128xf32, #tpu.memory_space<vmem>>, %arg6: memref<8x128xf32, #tpu.memory_space<vmem>>) attributes {dimension_semantics = [#tpu.dimension_semantics<parallel>, #tpu.dimension_semantics<arbitrary>], iteration_bounds = array<i64: 1, 1>, scalar_prefetch = 0 : i64, scratch_operands = 1 : i64, tpu.core_type = #tpu.core_type<tc>, window_params = [{transform_indices = @transform_0, window_bounds = array<i64: 1, 8, 8>}, {pipeline_mode = #tpu.pipeline_mode<synchronous>, transform_indices = @transform_1, window_bounds = array<i64: 16, 128>}, {pipeline_mode = #tpu.pipeline_mode<synchronous>, transform_indices = @transform_2, window_bounds = array<i64: 128, 128>}, {transform_indices = @transform_3, window_bounds = array<i64: 8, 128>}]} {
    %c0_i32 = arith.constant 0 : i32
    %0 = arith.cmpi eq, %arg1, %c0_i32 : i32
    %1 = arith.extui %0 : i1 to i32
    %c0_i32_0 = arith.constant 0 : i32
    %2 = arith.cmpi ne, %1, %c0_i32_0 : i32
    scf.if %2 {
      %cst_23 = arith.constant 0.000000e+00 : f32
      %77 = vector.broadcast %cst_23 : f32 to vector<8x128xf32>
      %c0_24 = arith.constant 0 : index
      %c0_25 = arith.constant 0 : index
      %78 = vector.load %arg6[%c0_24, %c0_25] : memref<8x128xf32, #tpu.memory_space<vmem>>, vector<8x128xf32>
      tpu.vector_store %arg6[%c0_24, %c0_25], %77 {strides = array<i32>} : memref<8x128xf32, #tpu.memory_space<vmem>>, vector<8x128xf32>,
      %cst_26 = arith.constant 0xFF800000 : f32
      %79 = vector.broadcast %cst_26 : f32 to vector<8x128xf32>
      %c0_27 = arith.constant 0 : index
      %c0_28 = arith.constant 0 : index
      %80 = vector.load %arg5[%c0_27, %c0_28] : memref<8x128xf32, #tpu.memory_space<vmem>>, vector<8x128xf32>
      tpu.vector_store %arg5[%c0_27, %c0_28], %79 {strides = array<i32>} : memref<8x128xf32, #tpu.memory_space<vmem>>, vector<8x128xf32>,
    } else {
    }
    %c0 = arith.constant 0 : index
    %c0_1 = arith.constant 0 : index
    %c0_2 = arith.constant 0 : index
    %3 = vector.load %arg2[%c0, %c0_1, %c0_2] : memref<1x8x8xi32, #tpu.memory_space<vmem>>, vector<1x8x8xi32>
    %4 = vector.shape_cast %3 : vector<1x8x8xi32> to vector<8x8xi32>
    %5 = vector.shape_cast %4 : vector<8x8xi32> to vector<8x8x1xi32>
    %6 = tpu.iota {dimensions = array<i32: 2>} : vector<8x8x16xi32>
    %7 = vector.broadcast %5 : vector<8x8x1xi32> to vector<8x8x16xi32>
    %8 = arith.cmpi eq, %7, %6 : vector<8x8x16xi32>
    %9 = arith.extui %8 : vector<8x8x16xi1> to vector<8x8x16xi32>
    %10 = arith.sitofp %9 : vector<8x8x16xi32> to vector<8x8x16xf32>
    %11 = arith.truncf %10 : vector<8x8x16xf32> to vector<8x8x16xbf16>
    %12 = vector.shape_cast %11 : vector<8x8x16xbf16> to vector<64x16xbf16>
    %c0_3 = arith.constant 0 : index
    %c0_4 = arith.constant 0 : index
    %13 = vector.load %arg3[%c0_3, %c0_4] : memref<16x128xbf16, #tpu.memory_space<vmem>>, vector<16x128xbf16>
    %cst = arith.constant dense<0.000000e+00> : vector<64x128xf32>
    %14 = tpu.matmul %12, %13, %cst {dimension_numbers = #tpu.dot_dimension_numbers<[1], [0], [0], [1], [0, 0, 1, 1], [], []>} : vector<64x16xbf16>, vector<16x128xbf16>, vector<64x128xf32> -> vector<64x128xf32>
    %15 = vector.shape_cast %14 : vector<64x128xf32> to vector<8x8x128xf32>
    %c0_5 = arith.constant 0 : index
    %c0_6 = arith.constant 0 : index
    %16 = vector.load %arg4[%c0_5, %c0_6] : memref<128x128xbf16, #tpu.memory_space<vmem>>, vector<128x128xbf16>
    %c0_7 = arith.constant 0 : index
    %c0_8 = arith.constant 0 : index
    %17 = vector.load %arg6[%c0_7, %c0_8] : memref<8x128xf32, #tpu.memory_space<vmem>>, vector<8x128xf32>
    %c0_9 = arith.constant 0 : index
    %c0_10 = arith.constant 0 : index
    %18 = vector.load %arg5[%c0_9, %c0_10] : memref<8x128xf32, #tpu.memory_space<vmem>>, vector<8x128xf32>
    %19 = vector.extract_strided_slice %15 {offsets = [0, 0, 0], sizes = [1, 8, 128], strides = [1, 1, 1]} : vector<8x8x128xf32> to vector<1x8x128xf32>
    %20 = vector.shape_cast %19 : vector<1x8x128xf32> to vector<8x128xf32>
    %21 = arith.truncf %17 : vector<8x128xf32> to vector<8x128xbf16>
    %cst_11 = arith.constant dense<0.000000e+00> : vector<8x128xf32>
    %22 = tpu.matmul %21, %16, %cst_11 {dimension_numbers = #tpu.dot_dimension_numbers<[1], [0], [0], [1], [0, 0, 1, 1], [], []>} : vector<8x128xbf16>, vector<128x128xbf16>, vector<8x128xf32> -> vector<8x128xf32>
    %23 = arith.addf %20, %22 : vector<8x128xf32>
    %24 = math.tanh %23 : vector<8x128xf32>
    %25 = arith.maximumf %18, %24 : vector<8x128xf32>
    %26 = vector.extract_strided_slice %15 {offsets = [1, 0, 0], sizes = [1, 8, 128], strides = [1, 1, 1]} : vector<8x8x128xf32> to vector<1x8x128xf32>
    %27 = vector.shape_cast %26 : vector<1x8x128xf32> to vector<8x128xf32>
    %28 = arith.truncf %24 : vector<8x128xf32> to vector<8x128xbf16>
    %cst_12 = arith.constant dense<0.000000e+00> : vector<8x128xf32>
    %29 = tpu.matmul %28, %16, %cst_12 {dimension_numbers = #tpu.dot_dimension_numbers<[1], [0], [0], [1], [0, 0, 1, 1], [], []>} : vector<8x128xbf16>, vector<128x128xbf16>, vector<8x128xf32> -> vector<8x128xf32>
    %30 = arith.addf %27, %29 : vector<8x128xf32>
    %31 = math.tanh %30 : vector<8x128xf32>
    %32 = arith.maximumf %25, %31 : vector<8x128xf32>
    %33 = vector.extract_strided_slice %15 {offsets = [2, 0, 0], sizes = [1, 8, 128], strides = [1, 1, 1]} : vector<8x8x128xf32> to vector<1x8x128xf32>
    %34 = vector.shape_cast %33 : vector<1x8x128xf32> to vector<8x128xf32>
    %35 = arith.truncf %31 : vector<8x128xf32> to vector<8x128xbf16>
    %cst_13 = arith.constant dense<0.000000e+00> : vector<8x128xf32>
    %36 = tpu.matmul %35, %16, %cst_13 {dimension_numbers = #tpu.dot_dimension_numbers<[1], [0], [0], [1], [0, 0, 1, 1], [], []>} : vector<8x128xbf16>, vector<128x128xbf16>, vector<8x128xf32> -> vector<8x128xf32>
    %37 = arith.addf %34, %36 : vector<8x128xf32>
    %38 = math.tanh %37 : vector<8x128xf32>
    %39 = arith.maximumf %32, %38 : vector<8x128xf32>
    %40 = vector.extract_strided_slice %15 {offsets = [3, 0, 0], sizes = [1, 8, 128], strides = [1, 1, 1]} : vector<8x8x128xf32> to vector<1x8x128xf32>
    %41 = vector.shape_cast %40 : vector<1x8x128xf32> to vector<8x128xf32>
    %42 = arith.truncf %38 : vector<8x128xf32> to vector<8x128xbf16>
    %cst_14 = arith.constant dense<0.000000e+00> : vector<8x128xf32>
    %43 = tpu.matmul %42, %16, %cst_14 {dimension_numbers = #tpu.dot_dimension_numbers<[1], [0], [0], [1], [0, 0, 1, 1], [], []>} : vector<8x128xbf16>, vector<128x128xbf16>, vector<8x128xf32> -> vector<8x128xf32>
    %44 = arith.addf %41, %43 : vector<8x128xf32>
    %45 = math.tanh %44 : vector<8x128xf32>
    %46 = arith.maximumf %39, %45 : vector<8x128xf32>
    %47 = vector.extract_strided_slice %15 {offsets = [4, 0, 0], sizes = [1, 8, 128], strides = [1, 1, 1]} : vector<8x8x128xf32> to vector<1x8x128xf32>
    %48 = vector.shape_cast %47 : vector<1x8x128xf32> to vector<8x128xf32>
    %49 = arith.truncf %45 : vector<8x128xf32> to vector<8x128xbf16>
    %cst_15 = arith.constant dense<0.000000e+00> : vector<8x128xf32>
    %50 = tpu.matmul %49, %16, %cst_15 {dimension_numbers = #tpu.dot_dimension_numbers<[1], [0], [0], [1], [0, 0, 1, 1], [], []>} : vector<8x128xbf16>, vector<128x128xbf16>, vector<8x128xf32> -> vector<8x128xf32>
    %51 = arith.addf %48, %50 : vector<8x128xf32>
    %52 = math.tanh %51 : vector<8x128xf32>
    %53 = arith.maximumf %46, %52 : vector<8x128xf32>
    %54 = vector.extract_strided_slice %15 {offsets = [5, 0, 0], sizes = [1, 8, 128], strides = [1, 1, 1]} : vector<8x8x128xf32> to vector<1x8x128xf32>
    %55 = vector.shape_cast %54 : vector<1x8x128xf32> to vector<8x128xf32>
    %56 = arith.truncf %52 : vector<8x128xf32> to vector<8x128xbf16>
    %cst_16 = arith.constant dense<0.000000e+00> : vector<8x128xf32>
    %57 = tpu.matmul %56, %16, %cst_16 {dimension_numbers = #tpu.dot_dimension_numbers<[1], [0], [0], [1], [0, 0, 1, 1], [], []>} : vector<8x128xbf16>, vector<128x128xbf16>, vector<8x128xf32> -> vector<8x128xf32>
    %58 = arith.addf %55, %57 : vector<8x128xf32>
    %59 = math.tanh %58 : vector<8x128xf32>
    %60 = arith.maximumf %53, %59 : vector<8x128xf32>
    %61 = vector.extract_strided_slice %15 {offsets = [6, 0, 0], sizes = [1, 8, 128], strides = [1, 1, 1]} : vector<8x8x128xf32> to vector<1x8x128xf32>
    %62 = vector.shape_cast %61 : vector<1x8x128xf32> to vector<8x128xf32>
    %63 = arith.truncf %59 : vector<8x128xf32> to vector<8x128xbf16>
    %cst_17 = arith.constant dense<0.000000e+00> : vector<8x128xf32>
    %64 = tpu.matmul %63, %16, %cst_17 {dimension_numbers = #tpu.dot_dimension_numbers<[1], [0], [0], [1], [0, 0, 1, 1], [], []>} : vector<8x128xbf16>, vector<128x128xbf16>, vector<8x128xf32> -> vector<8x128xf32>
    %65 = arith.addf %62, %64 : vector<8x128xf32>
    %66 = math.tanh %65 : vector<8x128xf32>
    %67 = arith.maximumf %60, %66 : vector<8x128xf32>
    %68 = vector.extract_strided_slice %15 {offsets = [7, 0, 0], sizes = [1, 8, 128], strides = [1, 1, 1]} : vector<8x8x128xf32> to vector<1x8x128xf32>
    %69 = vector.shape_cast %68 : vector<1x8x128xf32> to vector<8x128xf32>
    %70 = arith.truncf %66 : vector<8x128xf32> to vector<8x128xbf16>
    %cst_18 = arith.constant dense<0.000000e+00> : vector<8x128xf32>
    %71 = tpu.matmul %70, %16, %cst_18 {dimension_numbers = #tpu.dot_dimension_numbers<[1], [0], [0], [1], [0, 0, 1, 1], [], []>} : vector<8x128xbf16>, vector<128x128xbf16>, vector<8x128xf32> -> vector<8x128xf32>
    %72 = arith.addf %69, %71 : vector<8x128xf32>
    %73 = math.tanh %72 : vector<8x128xf32>
    %74 = arith.maximumf %67, %73 : vector<8x128xf32>
    %c0_19 = arith.constant 0 : index
    %c0_20 = arith.constant 0 : index
    %75 = vector.load %arg6[%c0_19, %c0_20] : memref<8x128xf32, #tpu.memory_space<vmem>>, vector<8x128xf32>
    tpu.vector_store %arg6[%c0_19, %c0_20], %73 {strides = array<i32>} : memref<8x128xf32, #tpu.memory_space<vmem>>, vector<8x128xf32>,
    %c0_21 = arith.constant 0 : index
    %c0_22 = arith.constant 0 : index
    %76 = vector.load %arg5[%c0_21, %c0_22] : memref<8x128xf32, #tpu.memory_space<vmem>>, vector<8x128xf32>
    tpu.vector_store %arg5[%c0_21, %c0_22], %74 {strides = array<i32>} : memref<8x128xf32, #tpu.memory_space<vmem>>, vector<8x128xf32>,
    return
  }
  func.func @transform_0(%arg0: i32, %arg1: i32) -> (i32, i32, i32) {
    %c0_i32 = arith.constant 0 : i32
    %c0_i32_0 = arith.constant 0 : i32
    return %arg0, %arg1, %c0_i32 : i32, i32, i32
  }
  func.func @transform_1(%arg0: i32, %arg1: i32) -> (i32, i32) {
    %c0_i32 = arith.constant 0 : i32
    %c0_i32_0 = arith.constant 0 : i32
    %c0_i32_1 = arith.constant 0 : i32
    return %c0_i32, %c0_i32_0 : i32, i32
  }
  func.func @transform_2(%arg0: i32, %arg1: i32) -> (i32, i32) {
    %c0_i32 = arith.constant 0 : i32
    %c0_i32_0 = arith.constant 0 : i32
    %c0_i32_1 = arith.constant 0 : i32
    return %c0_i32, %c0_i32_0 : i32, i32
  }
  func.func @transform_3(%arg0: i32, %arg1: i32) -> (i32, i32) {
    %c0_i32 = arith.constant 0 : i32
    %c0_i32_0 = arith.constant 0 : i32
    return %arg0, %c0_i32 : i32, i32
  }
}

</mosaic_0001>

<llo_original>
// kernel: tpu_custom_call.1
$region0: #{tpu_custom_call.1}
  #allocation0 [shape = 'u32[]', space=smem, size = 0x4, offset = 0x4, fixed_abs, tag = 'smem constant byte address 0x4 - core index']
  #allocation1 [shape = 'u32[144,128]{1,0:T(1,128)}', space=vmem, size = 0x12000, scoped, tag = 'internal scratch']
  #allocation2 [shape = 'f32[8,128]{1,0:T(8,128)}', space=vmem, size = 0x1000, scoped, tag = 'scratch operand']
  %s0 = inlined_call_operand.hbm [shape: s32[1,8,8], index: 0, kind: input, shape index: {}]
  %s1 = inlined_call_operand.hbm [shape: bf16[16,128], index: 1, kind: input, shape index: {}]
  %s2 = inlined_call_operand.hbm [shape: bf16[128,128], index: 2, kind: input, shape index: {}]
  %s3 = inlined_call_operand.hbm [shape: f32[8,128], index: 3, kind: output, shape index: {}]
  %s4 = sld [smem:[#allocation0]]
  $region38: #{tpu_custom_call.1} parent=0
    _
  %s6 = ssub.s32 1, %s4
  %s7 = scalar_select 0, %s6, %s4
  $region1: #{tpu_custom_call.1} parent=0
    #allocation3 [shape = 'u8[4096]{0}', space=vmem, size = 0x1000, scoped, tag = 'input window, operand 0, single buffered']
    #allocation4 [shape = 's32[1]{0}', space=sflag, size = 0x4, scoped, tag = 'scoped memory for tpu_custom_call.1']
    #allocation5 [shape = 's32[1]{0}', space=sflag, size = 0x4, scoped, tag = 'scoped memory for tpu_custom_call.1']
    #allocation6 [shape = 'u8[4096]{0}', space=vmem, size = 0x1000, scoped, tag = 'input window, operand 1, single buffered']
    #allocation7 [shape = 's32[1]{0}', space=sflag, size = 0x4, scoped, tag = 'scoped memory for tpu_custom_call.1']
    #allocation8 [shape = 'u8[32768]{0}', space=vmem, size = 0x8000, scoped, tag = 'input window, operand 2, single buffered']
    #allocation9 [shape = 'u8[4096]{0}', space=vmem, size = 0x1000, scoped, tag = 'output window, operand 0, single buffered']
    %8 = vsyncpa [#allocation4], 0
    %9 = vsyncpa [#allocation7], 0
    %10 = vsyncpa [#allocation5], 0
    // Predicated region
    $region2: #{tpu_custom_call.1} parent=1 // pred_check
      _
    $region3: #{tpu_custom_call.1} parent=1 // pred_check_branch
      %12 = sbr.rel (0) target = $region5
    $region4: #{tpu_custom_call.1} parent=1 // pred_region
      %s14 = ssub.s32 128, 128
      %15 = vsyncadd [#allocation4], %s14
      %s17 = sshll.u32 [#allocation3], 4
      %s18 = int_to_ptr.vmem [resolvable:$true] %s17
      %20 = dma.hbm_to_vmem [thread:$0]  %s0, 128, %s18, [#allocation4]
    $region5: #{tpu_custom_call.1} parent=1 // pred_fallthru
      _
    // Predicated region
    $region6: #{tpu_custom_call.1} parent=1 // pred_check
      _
    $region7: #{tpu_custom_call.1} parent=1 // pred_check_branch
      %22 = sbr.rel (0) target = $region9
    $region8: #{tpu_custom_call.1} parent=1 // pred_region
      %s24 = ssub.s32 128, 128
      %25 = vsyncadd [#allocation7], %s24
      %s26 = sshll.u32 [#allocation6], 4
      %s27 = int_to_ptr.vmem [resolvable:$true] %s26
      %32 = dma.hbm_to_vmem [thread:$0]  %s1, 128, %s27, [#allocation7], 64, 64, 4
    $region9: #{tpu_custom_call.1} parent=1 // pred_fallthru
      _
    // Predicated region
    $region10: #{tpu_custom_call.1} parent=1 // pred_check
      _
    $region11: #{tpu_custom_call.1} parent=1 // pred_check_branch
      %34 = sbr.rel (0) target = $region13
    $region12: #{tpu_custom_call.1} parent=1 // pred_region
      %s36 = ssub.s32 1024, 1024
      %37 = vsyncadd [#allocation7], %s36
      %s38 = sshll.u32 [#allocation8], 4
      %s39 = int_to_ptr.vmem [resolvable:$true] %s38
      %44 = dma.hbm_to_vmem [thread:$0]  %s2, 1024, %s39, [#allocation7], 64, 64, 4
    $region13: #{tpu_custom_call.1} parent=1 // pred_fallthru
      _
    // Predicated region
    $region14: #{tpu_custom_call.1} parent=1 // pred_check
      _
    $region15: #{tpu_custom_call.1} parent=1 // pred_check_branch
      %46 = sbr.rel (0) target = $region17
    $region16: #{tpu_custom_call.1} parent=1 // pred_region
      %47 = dma.done [#allocation4], 128
    $region17: #{tpu_custom_call.1} parent=1 // pred_fallthru
      _
    // Predicated region
    $region18: #{tpu_custom_call.1} parent=1 // pred_check
      _
    $region19: #{tpu_custom_call.1} parent=1 // pred_check_branch
      %49 = sbr.rel (0) target = $region21
    $region20: #{tpu_custom_call.1} parent=1 // pred_region
      %50 = dma.done [#allocation7], 128
    $region21: #{tpu_custom_call.1} parent=1 // pred_fallthru
      _
    // Predicated region
    $region22: #{tpu_custom_call.1} parent=1 // pred_check
      _
    $region23: #{tpu_custom_call.1} parent=1 // pred_check_branch
      %52 = sbr.rel (0) target = $region25
    $region24: #{tpu_custom_call.1} parent=1 // pred_region
      %53 = dma.done [#allocation7], 1024
    $region25: #{tpu_custom_call.1} parent=1 // pred_fallthru
      _
    %p55 = scmp.eq.s32.totalorder 0, 0
    // Predicated region
    $region26: #{tpu_custom_call.1} parent=1 // pred_check
      %p56 = pneg %p55
    $region27: #{tpu_custom_call.1} parent=1 // pred_check_branch
      %58 = sbr.rel (%p56) target = $region29
    $region28: #{tpu_custom_call.1} parent=1 // pred_region
      %59 = vst [vmem:[#allocation2] sm:$0xff] 0.0
      %60 = vst [vmem:[#allocation9] sm:$0xff] -inf
    $region29: #{tpu_custom_call.1} parent=1 // pred_fallthru
      _
    %v61 = vld [vmem:[#allocation3] sm:$0xff]
    %v62 = vlaneseq
    %v63 = vshrl.u32 %v62, 7
    %v64 = vsub.s32 0, %v63
    %v65 = vrot.slane %v61, %v64
    %67 = vbcast.lane.b32.xlu0 %v65, 256
    %v68 = vpop.permute.xlu0 %67
    %v69 = vlaneseq
    %v70 = vshrl.u32 %v69, 7
    %v71 = vsub.s32 1, %v70
    %v72 = vrot.slane %v61, %v71
    %74 = vbcast.lane.b32.xlu0 %v72, 256
    %v75 = vpop.permute.xlu0 %74
    %v76 = vlaneseq
    %v77 = vshrl.u32 %v76, 7
    %v78 = vsub.s32 2, %v77
    %v79 = vrot.slane %v61, %v78
    %81 = vbcast.lane.b32.xlu0 %v79, 256
    %v82 = vpop.permute.xlu0 %81
    %v83 = vlaneseq
    %v84 = vshrl.u32 %v83, 7
    %v85 = vsub.s32 3, %v84
    %v86 = vrot.slane %v61, %v85
    %88 = vbcast.lane.b32.xlu0 %v86, 256
    %v89 = vpop.permute.xlu0 %88
    %v90 = vlaneseq
    %v91 = vshrl.u32 %v90, 7
    %v92 = vsub.s32 4, %v91
    %v93 = vrot.slane %v61, %v92
    %95 = vbcast.lane.b32.xlu0 %v93, 256
    %v96 = vpop.permute.xlu0 %95
    %v97 = vlaneseq
    %v98 = vshrl.u32 %v97, 7
    %v99 = vsub.s32 5, %v98
    %v100 = vrot.slane %v61, %v99
    %102 = vbcast.lane.b32.xlu0 %v100, 256
    %v103 = vpop.permute.xlu0 %102
    %v104 = vlaneseq
    %v105 = vshrl.u32 %v104, 7
    %v106 = vsub.s32 6, %v105
    %v107 = vrot.slane %v61, %v106
    %109 = vbcast.lane.b32.xlu0 %v107, 256
    %v110 = vpop.permute.xlu0 %109
    %v111 = vlaneseq
    %v112 = vshrl.u32 %v111, 7
    %v113 = vsub.s32 7, %v112
    %v114 = vrot.slane %v61, %v113
    %116 = vbcast.lane.b32.xlu0 %v114, 256
    %v117 = vpop.permute.xlu0 %116
    %v118 = vlaneseq
    %v119 = vand.u32 %v118, 127
    %vm120 = vcmp.eq.s32.totalorder %v68, %v119
    %vm121 = vcmp.eq.s32.totalorder %v75, %v119
    %vm122 = vcmp.eq.s32.totalorder %v82, %v119
    %vm123 = vcmp.eq.s32.totalorder %v89, %v119
    %vm124 = vcmp.eq.s32.totalorder %v96, %v119
    %vm125 = vcmp.eq.s32.totalorder %v103, %v119
    %vm126 = vcmp.eq.s32.totalorder %v110, %v119
    %vm127 = vcmp.eq.s32.totalorder %v117, %v119
    %v128 = vsel %vm120, 1, 0
    %v129 = vsel %vm121, 1, 0
    %v130 = vsel %vm122, 1, 0
    %v131 = vsel %vm123, 1, 0
    %v132 = vsel %vm124, 1, 0
    %v133 = vsel %vm125, 1, 0
    %v134 = vsel %vm126, 1, 0
    %v135 = vsel %vm127, 1, 0
    %v136 = vcvt.s32.f32 %v128
    %v137 = vcvt.s32.f32 %v129
    %v138 = vcvt.s32.f32 %v130
    %v139 = vcvt.s32.f32 %v131
    %v140 = vcvt.s32.f32 %v132
    %v141 = vcvt.s32.f32 %v133
    %v142 = vcvt.s32.f32 %v134
    %v143 = vcvt.s32.f32 %v135
    %v144 = vpack.c.bf16 %v136, %v136
    %v145 = vpack.c.bf16 %v137, %v137
    %v146 = vpack.c.bf16 %v138, %v138
    %v147 = vpack.c.bf16 %v139, %v139
    %v148 = vpack.c.bf16 %v140, %v140
    %v149 = vpack.c.bf16 %v141, %v141
    %v150 = vpack.c.bf16 %v142, %v142
    %v151 = vpack.c.bf16 %v143, %v143
    %v152 = vld [vmem:[#allocation6] sm:$0xf]
    %v153 = vld [vmem:[#allocation6 + $0x4] sm:$0xf]
    %v162 = vunpack.c.l.b16 %v144
    %v163 = vunpack.c.l.b16 %v145
    %v164 = vunpack.c.l.b16 %v146
    %v165 = vunpack.c.l.b16 %v147
    %v166 = vunpack.c.l.b16 %v148
    %v167 = vunpack.c.l.b16 %v149
    %v168 = vunpack.c.l.b16 %v150
    %v169 = vunpack.c.l.b16 %v151
    %v170 = vpack.c.b16 %v163, %v162
    %v171 = vpack.c.b16 %v165, %v164
    %v172 = vpack.c.b16 %v167, %v166
    %v173 = vpack.c.b16 %v169, %v168
    %v176 = vunpack.c.l.b16 %v152
    %v177 = vunpack.c.l.b16 %v153
    %v178 = vpack.c.b16 %v177, %v176
    %vm180 = vcmask 130048
    %v182 = vsel %vm180, %v170, 0
    %v185 = vsel %vm180, %v171, 0
    %v188 = vsel %vm180, %v172, 0
    %v191 = vsel %vm180, %v173, 0
    %193 = vmatprep.subr.bf16.mxu0 0
    %194 = vmatpush1.bf16.msra.mxu0 %v178
    %195 = vmatprep.subr.bf16.mxu0 0
    %196 = vmatpush1.bf16.msra.mxu0 0
    %197 = vmatprep.subr.bf16.mxu0 0
    %198 = vmatpush1.bf16.msra.mxu0 0
    %199 = vmatprep.subr.bf16.mxu0 0
    %200 = vmatpush1.bf16.msra.mxu0 0
    %201 = vmatprep.subr.bf16.mxu0 0
    %202 = vmatpush1.bf16.msra.mxu0 0
    %203 = vmatprep.subr.bf16.mxu0 0
    %204 = vmatpush1.bf16.msra.mxu0 0
    %205 = vmatprep.subr.bf16.mxu0 0
    %206 = vmatpush1.bf16.msra.mxu0 0
    %207 = vmatprep.subr.bf16.mxu0 0
    %208 = vmatpush1.bf16.msra.mxu0 0
    %209 = vmatprep.subr.bf16.mxu0 0
    %210 = vmatpush1.bf16.msra.mxu0 0
    %211 = vmatprep.subr.bf16.mxu0 0
    %212 = vmatpush1.bf16.msra.mxu0 0
    %213 = vmatprep.subr.bf16.mxu0 0
    %214 = vmatpush1.bf16.msra.mxu0 0
    %215 = vmatprep.subr.bf16.mxu0 0
    %216 = vmatpush1.bf16.msra.mxu0 0
    %217 = vmatprep.subr.bf16.mxu0 0
    %218 = vmatpush1.bf16.msra.mxu0 0
    %219 = vmatprep.subr.bf16.mxu0 0
    %220 = vmatpush1.bf16.msra.mxu0 0
    %221 = vmatprep.subr.bf16.mxu0 0
    %222 = vmatpush1.bf16.msra.mxu0 0
    %223 = vmatprep.subr.bf16.mxu0 0
    %224 = vmatpush1.bf16.msra.mxu0 0
    %225 = vmatprep.mubr.bf16.mxu0 0
    %226 = vmatmul.mubr.bf16.gmra.mrb[0].mxu0 %v182
    %v227 = vpop.f32.mrb[0].mxu0
    %v228 = vadd.f32 0.0, %v227
    %v229 = vpop.f32.mrb[0].mxu0
    %v230 = vpop.f32.mrb[0].mxu0
    %v231 = vadd.f32 0.0, %v230
    %v232 = vpop.f32.mrb[0].mxu0
    %233 = vmatprep.mubr.bf16.mxu0 0
    %234 = vmatmul.mubr.bf16.gmra.mrb[0].mxu0 %v185
    %v235 = vpop.f32.mrb[0].mxu0
    %v236 = vadd.f32 0.0, %v235
    %v237 = vpop.f32.mrb[0].mxu0
    %v238 = vpop.f32.mrb[0].mxu0
    %v239 = vadd.f32 0.0, %v238
    %v240 = vpop.f32.mrb[0].mxu0
    %241 = vmatprep.mubr.bf16.mxu0 0
    %242 = vmatmul.mubr.bf16.gmra.mrb[0].mxu0 %v188
    %v243 = vpop.f32.mrb[0].mxu0
    %v244 = vadd.f32 0.0, %v243
    %v245 = vpop.f32.mrb[0].mxu0
    %v246 = vpop.f32.mrb[0].mxu0
    %v247 = vadd.f32 0.0, %v246
    %v248 = vpop.f32.mrb[0].mxu0
    %249 = vmatprep.mubr.bf16.mxu0 0
    %250 = vmatmul.mubr.bf16.gmra.mrb[0].mxu0 %v191
    %v251 = vpop.f32.mrb[0].mxu0
    %v252 = vadd.f32 0.0, %v251
    %v253 = vpop.f32.mrb[0].mxu0
    %v254 = vpop.f32.mrb[0].mxu0
    %v255 = vadd.f32 0.0, %v254
    %v256 = vpop.f32.mrb[0].mxu0
    %257 = vdwg.mxu0
    %v258 = vld [vmem:[#allocation8] sm:$0xf]
    %v259 = vld [vmem:[#allocation8 + $0x4] sm:$0xf]
    %v260 = vld [vmem:[#allocation8 + $0x8] sm:$0xf]
    %v261 = vld [vmem:[#allocation8 + $0xc] sm:$0xf]
    %v262 = vld [vmem:[#allocation8 + $0x10] sm:$0xf]
    %v263 = vld [vmem:[#allocation8 + $0x14] sm:$0xf]
    %v264 = vld [vmem:[#allocation8 + $0x18] sm:$0xf]
    %v265 = vld [vmem:[#allocation8 + $0x1c] sm:$0xf]
    %v266 = vld [vmem:[#allocation8 + $0x20] sm:$0xf]
    %v267 = vld [vmem:[#allocation8 + $0x24] sm:$0xf]
    %v268 = vld [vmem:[#allocation8 + $0x28] sm:$0xf]
    %v269 = vld [vmem:[#allocation8 + $0x2c] sm:$0xf]
    %v270 = vld [vmem:[#allocation8 + $0x30] sm:$0xf]
    %v271 = vld [vmem:[#allocation8 + $0x34] sm:$0xf]
    %v272 = vld [vmem:[#allocation8 + $0x38] sm:$0xf]
    %v273 = vld [vmem:[#allocation8 + $0x3c] sm:$0xf]
    %v274 = vld [vmem:[#allocation2] sm:$0xff]
    %v275 = vld [vmem:[#allocation9] sm:$0xff]
    %v276 = vpack.c.bf16 %v274, %v274
    %v293 = vunpack.c.l.b16 %v258
    %v294 = vunpack.c.l.b16 %v259
    %v295 = vunpack.c.l.b16 %v260
    %v296 = vunpack.c.l.b16 %v261
    %v297 = vunpack.c.l.b16 %v262
    %v298 = vunpack.c.l.b16 %v263
    %v299 = vunpack.c.l.b16 %v264
    %v300 = vunpack.c.l.b16 %v265
    %v301 = vunpack.c.l.b16 %v266
    %v302 = vunpack.c.l.b16 %v267
    %v303 = vunpack.c.l.b16 %v268
    %v304 = vunpack.c.l.b16 %v269
    %v305 = vunpack.c.l.b16 %v270
    %v306 = vunpack.c.l.b16 %v271
    %v307 = vunpack.c.l.b16 %v272
    %v308 = vunpack.c.l.b16 %v273
    %v309 = vpack.c.b16 %v294, %v293
    %v310 = vpack.c.b16 %v296, %v295
    %v311 = vpack.c.b16 %v298, %v297
    %v312 = vpack.c.b16 %v300, %v299
    %v313 = vpack.c.b16 %v302, %v301
    %v314 = vpack.c.b16 %v304, %v303
    %v315 = vpack.c.b16 %v306, %v305
    %v316 = vpack.c.b16 %v308, %v307
    %325 = vmatprep.subr.bf16.mxu0 0
    %326 = vmatpush1.bf16.msra.mxu0 %v309
    %327 = vmatprep.subr.bf16.mxu0 0
    %328 = vmatpush1.bf16.msra.mxu0 %v310
    %329 = vmatprep.subr.bf16.mxu0 0
    %330 = vmatpush1.bf16.msra.mxu0 %v311
    %331 = vmatprep.subr.bf16.mxu0 0
    %332 = vmatpush1.bf16.msra.mxu0 %v312
    %333 = vmatprep.subr.bf16.mxu0 0
    %334 = vmatpush1.bf16.msra.mxu0 %v313
    %335 = vmatprep.subr.bf16.mxu0 0
    %336 = vmatpush1.bf16.msra.mxu0 %v314
    %337 = vmatprep.subr.bf16.mxu0 0
    %338 = vmatpush1.bf16.msra.mxu0 %v315
    %339 = vmatprep.subr.bf16.mxu0 0
    %340 = vmatpush1.bf16.msra.mxu0 %v316
    %341 = vmatprep.subr.bf16.mxu0 0
    %342 = vmatpush1.bf16.msra.mxu0 0
    %343 = vmatprep.subr.bf16.mxu0 0
    %344 = vmatpush1.bf16.msra.mxu0 0
    %345 = vmatprep.subr.bf16.mxu0 0
    %346 = vmatpush1.bf16.msra.mxu0 0
    %347 = vmatprep.subr.bf16.mxu0 0
    %348 = vmatpush1.bf16.msra.mxu0 0
    %349 = vmatprep.subr.bf16.mxu0 0
    %350 = vmatpush1.bf16.msra.mxu0 0
    %351 = vmatprep.subr.bf16.mxu0 0
    %352 = vmatpush1.bf16.msra.mxu0 0
    %353 = vmatprep.subr.bf16.mxu0 0
    %354 = vmatpush1.bf16.msra.mxu0 0
    %355 = vmatprep.subr.bf16.mxu0 0
    %356 = vmatpush1.bf16.msra.mxu0 0
    %357 = vmatprep.mubr.bf16.mxu0 0
    %358 = vmatmul.mubr.bf16.gmra.mrb[0].mxu0 %v276
    %v359 = vpop.f32.mrb[0].mxu0
    %v360 = vadd.f32 0.0, %v359
    %v361 = vpop.f32.mrb[0].mxu0
    %v362 = vpop.f32.mrb[0].mxu0
    %v363 = vpop.f32.mrb[0].mxu0
    %364 = vdwg.mxu0
    %v365 = vadd.f32 %v228, %v360
    %v366 = vtanh.pop %v365
    %v367 = vmax.f32 %v275, %v366
    %v368 = vpack.c.bf16 %v366, %v366
    %369 = vmatprep.subr.bf16.mxu0 0
    %370 = vmatpush1.bf16.msra.mxu0 %v309
    %371 = vmatprep.subr.bf16.mxu0 0
    %372 = vmatpush1.bf16.msra.mxu0 %v310
    %373 = vmatprep.subr.bf16.mxu0 0
    %374 = vmatpush1.bf16.msra.mxu0 %v311
    %375 = vmatprep.subr.bf16.mxu0 0
    %376 = vmatpush1.bf16.msra.mxu0 %v312
    %377 = vmatprep.subr.bf16.mxu0 0
    %378 = vmatpush1.bf16.msra.mxu0 %v313
    %379 = vmatprep.subr.bf16.mxu0 0
    %380 = vmatpush1.bf16.msra.mxu0 %v314
    %381 = vmatprep.subr.bf16.mxu0 0
    %382 = vmatpush1.bf16.msra.mxu0 %v315
    %383 = vmatprep.subr.bf16.mxu0 0
    %384 = vmatpush1.bf16.msra.mxu0 %v316
    %385 = vmatprep.subr.bf16.mxu0 0
    %386 = vmatpush1.bf16.msra.mxu0 0
    %387 = vmatprep.subr.bf16.mxu0 0
    %388 = vmatpush1.bf16.msra.mxu0 0
    %389 = vmatprep.subr.bf16.mxu0 0
    %390 = vmatpush1.bf16.msra.mxu0 0
    %391 = vmatprep.subr.bf16.mxu0 0
    %392 = vmatpush1.bf16.msra.mxu0 0
    %393 = vmatprep.subr.bf16.mxu0 0
    %394 = vmatpush1.bf16.msra.mxu0 0
    %395 = vmatprep.subr.bf16.mxu0 0
    %396 = vmatpush1.bf16.msra.mxu0 0
    %397 = vmatprep.subr.bf16.mxu0 0
    %398 = vmatpush1.bf16.msra.mxu0 0
    %399 = vmatprep.subr.bf16.mxu0 0
    %400 = vmatpush1.bf16.msra.mxu0 0
    %401 = vmatprep.mubr.bf16.mxu0 0
    %402 = vmatmul.mubr.bf16.gmra.mrb[0].mxu0 %v368
    %v403 = vpop.f32.mrb[0].mxu0
    %v404 = vadd.f32 0.0, %v403
    %v405 = vpop.f32.mrb[0].mxu0
    %v406 = vpop.f32.mrb[0].mxu0
    %v407 = vpop.f32.mrb[0].mxu0
    %408 = vdwg.mxu0
    %v409 = vadd.f32 %v231, %v404
    %v410 = vtanh.pop %v409
    %v411 = vmax.f32 %v367, %v410
    %v412 = vpack.c.bf16 %v410, %v410
    %413 = vmatprep.subr.bf16.mxu0 0
    %414 = vmatpush1.bf16.msra.mxu0 %v309
    %415 = vmatprep.subr.bf16.mxu0 0
    %416 = vmatpush1.bf16.msra.mxu0 %v310
    %417 = vmatprep.subr.bf16.mxu0 0
    %418 = vmatpush1.bf16.msra.mxu0 %v311
    %419 = vmatprep.subr.bf16.mxu0 0
    %420 = vmatpush1.bf16.msra.mxu0 %v312
    %421 = vmatprep.subr.bf16.mxu0 0
    %422 = vmatpush1.bf16.msra.mxu0 %v313
    %423 = vmatprep.subr.bf16.mxu0 0
    %424 = vmatpush1.bf16.msra.mxu0 %v314
    %425 = vmatprep.subr.bf16.mxu0 0
    %426 = vmatpush1.bf16.msra.mxu0 %v315
    %427 = vmatprep.subr.bf16.mxu0 0
    %428 = vmatpush1.bf16.msra.mxu0 %v316
    %429 = vmatprep.subr.bf16.mxu0 0
    %430 = vmatpush1.bf16.msra.mxu0 0
    %431 = vmatprep.subr.bf16.mxu0 0
    %432 = vmatpush1.bf16.msra.mxu0 0
    %433 = vmatprep.subr.bf16.mxu0 0
    %434 = vmatpush1.bf16.msra.mxu0 0
    %435 = vmatprep.subr.bf16.mxu0 0
    %436 = vmatpush1.bf16.msra.mxu0 0
    %437 = vmatprep.subr.bf16.mxu0 0
    %438 = vmatpush1.bf16.msra.mxu0 0
    %439 = vmatprep.subr.bf16.mxu0 0
    %440 = vmatpush1.bf16.msra.mxu0 0
    %441 = vmatprep.subr.bf16.mxu0 0
    %442 = vmatpush1.bf16.msra.mxu0 0
    %443 = vmatprep.subr.bf16.mxu0 0
    %444 = vmatpush1.bf16.msra.mxu0 0
    %445 = vmatprep.mubr.bf16.mxu0 0
    %446 = vmatmul.mubr.bf16.gmra.mrb[0].mxu0 %v412
    %v447 = vpop.f32.mrb[0].mxu0
    %v448 = vadd.f32 0.0, %v447
    %v449 = vpop.f32.mrb[0].mxu0
    %v450 = vpop.f32.mrb[0].mxu0
    %v451 = vpop.f32.mrb[0].mxu0
    %452 = vdwg.mxu0
    %v453 = vadd.f32 %v236, %v448
    %v454 = vtanh.pop %v453
    %v455 = vmax.f32 %v411, %v454
    %v456 = vpack.c.bf16 %v454, %v454
    %457 = vmatprep.subr.bf16.mxu0 0
    %458 = vmatpush1.bf16.msra.mxu0 %v309
    %459 = vmatprep.subr.bf16.mxu0 0
    %460 = vmatpush1.bf16.msra.mxu0 %v310
    %461 = vmatprep.subr.bf16.mxu0 0
    %462 = vmatpush1.bf16.msra.mxu0 %v311
    %463 = vmatprep.subr.bf16.mxu0 0
    %464 = vmatpush1.bf16.msra.mxu0 %v312
    %465 = vmatprep.subr.bf16.mxu0 0
    %466 = vmatpush1.bf16.msra.mxu0 %v313
    %467 = vmatprep.subr.bf16.mxu0 0
    %468 = vmatpush1.bf16.msra.mxu0 %v314
    %469 = vmatprep.subr.bf16.mxu0 0
    %470 = vmatpush1.bf16.msra.mxu0 %v315
    %471 = vmatprep.subr.bf16.mxu0 0
    %472 = vmatpush1.bf16.msra.mxu0 %v316
    %473 = vmatprep.subr.bf16.mxu0 0
    %474 = vmatpush1.bf16.msra.mxu0 0
    %475 = vmatprep.subr.bf16.mxu0 0
    %476 = vmatpush1.bf16.msra.mxu0 0
    %477 = vmatprep.subr.bf16.mxu0 0
    %478 = vmatpush1.bf16.msra.mxu0 0
    %479 = vmatprep.subr.bf16.mxu0 0
    %480 = vmatpush1.bf16.msra.mxu0 0
    %481 = vmatprep.subr.bf16.mxu0 0
    %482 = vmatpush1.bf16.msra.mxu0 0
    %483 = vmatprep.subr.bf16.mxu0 0
    %484 = vmatpush1.bf16.msra.mxu0 0
    %485 = vmatprep.subr.bf16.mxu0 0
    %486 = vmatpush1.bf16.msra.mxu0 0
    %487 = vmatprep.subr.bf16.mxu0 0
    %488 = vmatpush1.bf16.msra.mxu0 0
    %489 = vmatprep.mubr.bf16.mxu0 0
    %490 = vmatmul.mubr.bf16.gmra.mrb[0].mxu0 %v456
    %v491 = vpop.f32.mrb[0].mxu0
    %v492 = vadd.f32 0.0, %v491
    %v493 = vpop.f32.mrb[0].mxu0
    %v494 = vpop.f32.mrb[0].mxu0
    %v495 = vpop.f32.mrb[0].mxu0
    %496 = vdwg.mxu0
    %v497 = vadd.f32 %v239, %v492
    %v498 = vtanh.pop %v497
    %v499 = vmax.f32 %v455, %v498
    %v500 = vpack.c.bf16 %v498, %v498
    %501 = vmatprep.subr.bf16.mxu0 0
    %502 = vmatpush1.bf16.msra.mxu0 %v309
    %503 = vmatprep.subr.bf16.mxu0 0
    %504 = vmatpush1.bf16.msra.mxu0 %v310
    %505 = vmatprep.subr.bf16.mxu0 0
    %506 = vmatpush1.bf16.msra.mxu0 %v311
    %507 = vmatprep.subr.bf16.mxu0 0
    %508 = vmatpush1.bf16.msra.mxu0 %v312
    %509 = vmatprep.subr.bf16.mxu0 0
    %510 = vmatpush1.bf16.msra.mxu0 %v313
    %511 = vmatprep.subr.bf16.mxu0 0
    %512 = vmatpush1.bf16.msra.mxu0 %v314
    %513 = vmatprep.subr.bf16.mxu0 0
    %514 = vmatpush1.bf16.msra.mxu0 %v315
    %515 = vmatprep.subr.bf16.mxu0 0
    %516 = vmatpush1.bf16.msra.mxu0 %v316
    %517 = vmatprep.subr.bf16.mxu0 0
    %518 = vmatpush1.bf16.msra.mxu0 0
    %519 = vmatprep.subr.bf16.mxu0 0
    %520 = vmatpush1.bf16.msra.mxu0 0
    %521 = vmatprep.subr.bf16.mxu0 0
    %522 = vmatpush1.bf16.msra.mxu0 0
    %523 = vmatprep.subr.bf16.mxu0 0
    %524 = vmatpush1.bf16.msra.mxu0 0
    %525 = vmatprep.subr.bf16.mxu0 0
    %526 = vmatpush1.bf16.msra.mxu0 0
    %527 = vmatprep.subr.bf16.mxu0 0
    %528 = vmatpush1.bf16.msra.mxu0 0
    %529 = vmatprep.subr.bf16.mxu0 0
    %530 = vmatpush1.bf16.msra.mxu0 0
    %531 = vmatprep.subr.bf16.mxu0 0
    %532 = vmatpush1.bf16.msra.mxu0 0
    %533 = vmatprep.mubr.bf16.mxu0 0
    %534 = vmatmul.mubr.bf16.gmra.mrb[0].mxu0 %v500
    %v535 = vpop.f32.mrb[0].mxu0
    %v536 = vadd.f32 0.0, %v535
    %v537 = vpop.f32.mrb[0].mxu0
    %v538 = vpop.f32.mrb[0].mxu0
    %v539 = vpop.f32.mrb[0].mxu0
    %540 = vdwg.mxu0
    %v541 = vadd.f32 %v244, %v536
    %v542 = vtanh.pop %v541
    %v543 = vmax.f32 %v499, %v542
    %v544 = vpack.c.bf16 %v542, %v542
    %545 = vmatprep.subr.bf16.mxu0 0
    %546 = vmatpush1.bf16.msra.mxu0 %v309
    %547 = vmatprep.subr.bf16.mxu0 0
    %548 = vmatpush1.bf16.msra.mxu0 %v310
    %549 = vmatprep.subr.bf16.mxu0 0
    %550 = vmatpush1.bf16.msra.mxu0 %v311
    %551 = vmatprep.subr.bf16.mxu0 0
    %552 = vmatpush1.bf16.msra.mxu0 %v312
    %553 = vmatprep.subr.bf16.mxu0 0
    %554 = vmatpush1.bf16.msra.mxu0 %v313
    %555 = vmatprep.subr.bf16.mxu0 0
    %556 = vmatpush1.bf16.msra.mxu0 %v314
    %557 = vmatprep.subr.bf16.mxu0 0
    %558 = vmatpush1.bf16.msra.mxu0 %v315
    %559 = vmatprep.subr.bf16.mxu0 0
    %560 = vmatpush1.bf16.msra.mxu0 %v316
    %561 = vmatprep.subr.bf16.mxu0 0
    %562 = vmatpush1.bf16.msra.mxu0 0
    %563 = vmatprep.subr.bf16.mxu0 0
    %564 = vmatpush1.bf16.msra.mxu0 0
    %565 = vmatprep.subr.bf16.mxu0 0
    %566 = vmatpush1.bf16.msra.mxu0 0
    %567 = vmatprep.subr.bf16.mxu0 0
    %568 = vmatpush1.bf16.msra.mxu0 0
    %569 = vmatprep.subr.bf16.mxu0 0
    %570 = vmatpush1.bf16.msra.mxu0 0
    %571 = vmatprep.subr.bf16.mxu0 0
    %572 = vmatpush1.bf16.msra.mxu0 0
    %573 = vmatprep.subr.bf16.mxu0 0
    %574 = vmatpush1.bf16.msra.mxu0 0
    %575 = vmatprep.subr.bf16.mxu0 0
    %576 = vmatpush1.bf16.msra.mxu0 0
    %577 = vmatprep.mubr.bf16.mxu0 0
    %578 = vmatmul.mubr.bf16.gmra.mrb[0].mxu0 %v544
    %v579 = vpop.f32.mrb[0].mxu0
    %v580 = vadd.f32 0.0, %v579
    %v581 = vpop.f32.mrb[0].mxu0
    %v582 = vpop.f32.mrb[0].mxu0
    %v583 = vpop.f32.mrb[0].mxu0
    %584 = vdwg.mxu0
    %v585 = vadd.f32 %v247, %v580
    %v586 = vtanh.pop %v585
    %v587 = vmax.f32 %v543, %v586
    %v588 = vpack.c.bf16 %v586, %v586
    %589 = vmatprep.subr.bf16.mxu0 0
    %590 = vmatpush1.bf16.msra.mxu0 %v309
    %591 = vmatprep.subr.bf16.mxu0 0
    %592 = vmatpush1.bf16.msra.mxu0 %v310
    %593 = vmatprep.subr.bf16.mxu0 0
    %594 = vmatpush1.bf16.msra.mxu0 %v311
    %595 = vmatprep.subr.bf16.mxu0 0
    %596 = vmatpush1.bf16.msra.mxu0 %v312
    %597 = vmatprep.subr.bf16.mxu0 0
    %598 = vmatpush1.bf16.msra.mxu0 %v313
    %599 = vmatprep.subr.bf16.mxu0 0
    %600 = vmatpush1.bf16.msra.mxu0 %v314
    %601 = vmatprep.subr.bf16.mxu0 0
    %602 = vmatpush1.bf16.msra.mxu0 %v315
    %603 = vmatprep.subr.bf16.mxu0 0
    %604 = vmatpush1.bf16.msra.mxu0 %v316
    %605 = vmatprep.subr.bf16.mxu0 0
    %606 = vmatpush1.bf16.msra.mxu0 0
    %607 = vmatprep.subr.bf16.mxu0 0
    %608 = vmatpush1.bf16.msra.mxu0 0
    %609 = vmatprep.subr.bf16.mxu0 0
    %610 = vmatpush1.bf16.msra.mxu0 0
    %611 = vmatprep.subr.bf16.mxu0 0
    %612 = vmatpush1.bf16.msra.mxu0 0
    %613 = vmatprep.subr.bf16.mxu0 0
    %614 = vmatpush1.bf16.msra.mxu0 0
    %615 = vmatprep.subr.bf16.mxu0 0
    %616 = vmatpush1.bf16.msra.mxu0 0
    %617 = vmatprep.subr.bf16.mxu0 0
    %618 = vmatpush1.bf16.msra.mxu0 0
    %619 = vmatprep.subr.bf16.mxu0 0
    %620 = vmatpush1.bf16.msra.mxu0 0
    %621 = vmatprep.mubr.bf16.mxu0 0
    %622 = vmatmul.mubr.bf16.gmra.mrb[0].mxu0 %v588
    %v623 = vpop.f32.mrb[0].mxu0
    %v624 = vadd.f32 0.0, %v623
    %v625 = vpop.f32.mrb[0].mxu0
    %v626 = vpop.f32.mrb[0].mxu0
    %v627 = vpop.f32.mrb[0].mxu0
    %628 = vdwg.mxu0
    %v629 = vadd.f32 %v252, %v624
    %v630 = vtanh.pop %v629
    %v631 = vmax.f32 %v587, %v630
    %v632 = vpack.c.bf16 %v630, %v630
    %633 = vmatprep.subr.bf16.mxu0 0
    %634 = vmatpush1.bf16.msra.mxu0 %v309
    %635 = vmatprep.subr.bf16.mxu0 0
    %636 = vmatpush1.bf16.msra.mxu0 %v310
    %637 = vmatprep.subr.bf16.mxu0 0
    %638 = vmatpush1.bf16.msra.mxu0 %v311
    %639 = vmatprep.subr.bf16.mxu0 0
    %640 = vmatpush1.bf16.msra.mxu0 %v312
    %641 = vmatprep.subr.bf16.mxu0 0
    %642 = vmatpush1.bf16.msra.mxu0 %v313
    %643 = vmatprep.subr.bf16.mxu0 0
    %644 = vmatpush1.bf16.msra.mxu0 %v314
    %645 = vmatprep.subr.bf16.mxu0 0
    %646 = vmatpush1.bf16.msra.mxu0 %v315
    %647 = vmatprep.subr.bf16.mxu0 0
    %648 = vmatpush1.bf16.msra.mxu0 %v316
    %649 = vmatprep.subr.bf16.mxu0 0
    %650 = vmatpush1.bf16.msra.mxu0 0
    %651 = vmatprep.subr.bf16.mxu0 0
    %652 = vmatpush1.bf16.msra.mxu0 0
    %653 = vmatprep.subr.bf16.mxu0 0
    %654 = vmatpush1.bf16.msra.mxu0 0
    %655 = vmatprep.subr.bf16.mxu0 0
    %656 = vmatpush1.bf16.msra.mxu0 0
    %657 = vmatprep.subr.bf16.mxu0 0
    %658 = vmatpush1.bf16.msra.mxu0 0
    %659 = vmatprep.subr.bf16.mxu0 0
    %660 = vmatpush1.bf16.msra.mxu0 0
    %661 = vmatprep.subr.bf16.mxu0 0
    %662 = vmatpush1.bf16.msra.mxu0 0
    %663 = vmatprep.subr.bf16.mxu0 0
    %664 = vmatpush1.bf16.msra.mxu0 0
    %665 = vmatprep.mubr.bf16.mxu0 0
    %666 = vmatmul.mubr.bf16.gmra.mrb[0].mxu0 %v632
    %v667 = vpop.f32.mrb[0].mxu0
    %v668 = vadd.f32 0.0, %v667
    %v669 = vpop.f32.mrb[0].mxu0
    %v670 = vpop.f32.mrb[0].mxu0
    %v671 = vpop.f32.mrb[0].mxu0
    %672 = vdwg.mxu0
    %v673 = vadd.f32 %v255, %v668
    %v674 = vtanh.pop %v673
    %v675 = vmax.f32 %v631, %v674
    %676 = vst [vmem:[#allocation2] sm:$0xff] %v674
    %677 = vst [vmem:[#allocation9] sm:$0xff] %v675
    // Predicated region
    $region30: #{tpu_custom_call.1} parent=1 // pred_check
      _
    $region31: #{tpu_custom_call.1} parent=1 // pred_check_branch
      %679 = sbr.rel (0) target = $region33
    $region32: #{tpu_custom_call.1} parent=1 // pred_region
      %s681 = ssub.s32 128, 128
      %682 = vsyncadd [#allocation5], %s681
      %s684 = sshll.u32 [#allocation9], 4
      %s685 = int_to_ptr.vmem [resolvable:$true] %s684
      %687 = dma.vmem_to_hbm [thread:$0]  %s685, 128, %s3, [#allocation5]
    $region33: #{tpu_custom_call.1} parent=1 // pred_fallthru
      _
    // Predicated region
    $region34: #{tpu_custom_call.1} parent=1 // pred_check
      _
    $region35: #{tpu_custom_call.1} parent=1 // pred_check_branch
      %689 = sbr.rel (0) target = $region37
    $region36: #{tpu_custom_call.1} parent=1 // pred_region
      %690 = dma.done [#allocation5], 128
    $region37: #{tpu_custom_call.1} parent=1 // pred_fallthru
      _
    %691 = vsyncpa [#allocation4], 1
    %692 = vsyncpa [#allocation7], 1
    %693 = vsyncpa [#allocation5], 1

</llo_original>
